<compile_context>
chip_gen: v7x
topology: tpu7x:2x2x1
jax: 0.10.0
libtpu: 0.0.40
codegen_flags: <defaults>
</compile_context>

<pallas_src>
import jax
import jax.numpy as jnp
from jax.experimental import pallas as pl
from jax.experimental.pallas import tpu as pltpu


def vae_kernel(x_ref, eps_ref, w1_ref, wenc_ref, w3_ref, wdec_ref, bias_ref,
               out_ref):
    d_in = x_ref.shape[-1]
    L = eps_ref.shape[-1]
    H = w1_ref.shape[-1]

    x = x_ref[...]
    eps = eps_ref[...]

    # merged bias slab: [b1 (H) | b21|b22 (2L) | b3 (H) | b41|b42 (2*D_in)]
    bias = bias_ref[...]
    b1 = bias[:, :H]
    benc = bias[:, H:H + 2 * L]
    b3 = bias[:, H + 2 * L:2 * H + 2 * L]
    bdec = bias[:, 2 * H + 2 * L:]

    # ---- encode ----  (bf16 MXU dots, f32 accumulate, f32 epilogue)
    h1 = jnp.tanh(
        jnp.dot(x.astype(jnp.bfloat16), w1_ref[...],
                preferred_element_type=jnp.float32) + b1)
    # fused mean|logvar head: one MXU dot instead of two
    enc = jnp.dot(h1.astype(jnp.bfloat16), wenc_ref[...],
                  preferred_element_type=jnp.float32) + benc
    z_mean = enc[:, :L]
    z_logvar = enc[:, L:]

    # ---- reparameterize ----  (epsilon supplied from outside the kernel)
    z = z_mean + jnp.exp(0.5 * z_logvar) * eps

    # ---- decode (data_type == 'real') ----
    h3 = jnp.tanh(
        jnp.dot(z.astype(jnp.bfloat16), w3_ref[...],
                preferred_element_type=jnp.float32) + b3)
    dec = jnp.dot(h3.astype(jnp.bfloat16), wdec_ref[...],
                  preferred_element_type=jnp.float32) + bdec

    # sigmoid only on the dec_mean half: sigmoid(v) = 0.5*(tanh(0.5*v)+1)  (EUP)
    dec_mean = 0.5 * (jnp.tanh(0.5 * dec[:, :d_in]) + 1.0)
    dec_logvar = dec[:, d_in:]

    # single lane-dense packed output slab: one wide store per grid step
    out_ref[...] = jnp.concatenate([enc, dec_mean, dec_logvar], axis=-1)


def pack_params(params):
    """Fuse mean/logvar heads, cast matmul weights to bf16, merge biases (f32)."""
    (w1, b1, w21, b21, w22, b22, w3, b3, w41, b41, w42, b42) = params
    wenc = jnp.concatenate([w21, w22], axis=1)                       # (H, 2L)
    wdec = jnp.concatenate([w41, w42], axis=1)                       # (H, 2*D_in)
    bias = jnp.concatenate([b1, b21, b22, b3, b41, b42], axis=1)     # (1, H+2L+H+2D)
    bf16 = lambda w: w.astype(jnp.bfloat16)
    return (bf16(w1), bf16(wenc), bf16(w3), bf16(wdec), bias)


def _round_up(n, m):
    return ((n + m - 1) // m) * m


def _pick_batch_tile(B):
    # Fixed large tile + padded cdiv-style grid (no divisor search).
    return 256 if B > 256 else _round_up(B, 8)


def _build_call(B_pad, tb, d_in, L, packed_params, cost, vmem_limit,
                single_buffer_weights):
    (w1, wenc, w3, wdec, bias) = packed_params
    out_w = 2 * L + 2 * d_in

    rowmap = lambda i: (i, 0)
    fixed = lambda i: (0, 0)

    def wspec(arr):
        if single_buffer_weights:
            # Constant-index blocks: no point double-buffering them.
            return pl.BlockSpec(arr.shape, fixed, pipeline_mode=pl.Buffered(1))
        return pl.BlockSpec(arr.shape, fixed)

    in_specs = [
        pl.BlockSpec((tb, d_in), rowmap),   # x
        pl.BlockSpec((tb, L), rowmap),      # eps
        wspec(w1), wspec(wenc), wspec(w3), wspec(wdec), wspec(bias),
    ]
    out_specs = pl.BlockSpec((tb, out_w), rowmap)
    out_shape = jax.ShapeDtypeStruct((B_pad, out_w), jnp.float32)

    # On v7x one could use pltpu.CORE_PARALLEL on this axis (needs >=2 grid
    # steps) to shard the batch across both TensorCores; "parallel" is the
    # portable default across v5e/v6e/v7x.
    return pl.pallas_call(
        vae_kernel,
        out_shape=out_shape,
        grid=(B_pad // tb,),
        in_specs=in_specs,
        out_specs=out_specs,
        compiler_params=pltpu.CompilerParams(
            dimension_semantics=("parallel",),
            vmem_limit_bytes=vmem_limit),
        cost_estimate=cost,
    )


def vae_forward(x, eps, packed_params):
    """x: (B, D_in) f32, eps: (B, L) f32 (the randn_like draw for reparameterize).
    packed_params: output of pack_params(). Returns (z_mean, z_logvar,
    dec_mean, dec_logvar)."""
    B, d_in = x.shape
    L = eps.shape[1]
    (w1, wenc, w3, wdec, bias) = packed_params
    H = w1.shape[1]
    out_w = 2 * L + 2 * d_in

    tb = _pick_batch_tile(B)
    B_pad = _round_up(B, tb)
    if B_pad != B:
        x = jnp.pad(x, ((0, B_pad - B), (0, 0)))
        eps = jnp.pad(eps, ((0, B_pad - B), (0, 0)))

    # Cost estimate (bf16 weights, sigmoid only over d_in lanes).
    flops = 2 * B_pad * (d_in * H + H * 2 * L + L * H + H * 2 * d_in)
    transcendentals = B_pad * (H + L + H + d_in)
    weight_bytes = sum(int(p.size) * p.dtype.itemsize
                       for p in (w1, wenc, w3, wdec, bias))
    io_bytes = (int(x.size) + int(eps.size) + B_pad * out_w) * 4
    cost = pl.CostEstimate(flops=flops, transcendentals=transcendentals,
                           bytes_accessed=weight_bytes + io_bytes)

    # Explicit scoped-VMEM budget: resident weights (<=2 buffers) plus
    # double-buffered activation/output tiles, with 2x headroom, clamped to
    # 64 MiB so the same budget also fits v7x physical VMEM.
    act_tile_bytes = tb * (d_in + L + out_w) * 4
    need = 2 * weight_bytes + 2 * act_tile_bytes
    vmem_limit = int(min(64 << 20, max(32 << 20, 2 * need)))

    args = (x, eps, w1, wenc, w3, wdec, bias)
    try:
        out = _build_call(B_pad, tb, d_in, L, packed_params, cost, vmem_limit,
                          single_buffer_weights=True)(*args)
    except Exception:
        # pl.Buffered(1) not accepted by this jax version: default buffering.
        out = _build_call(B_pad, tb, d_in, L, packed_params, cost, vmem_limit,
                          single_buffer_weights=False)(*args)

    out = out[:B]
    z_mean = out[:, :L]
    z_logvar = out[:, L:2 * L]
    dec_mean = out[:, 2 * L:2 * L + d_in]
    dec_logvar = out[:, 2 * L + d_in:]
    return z_mean, z_logvar, dec_mean, dec_logvar


def init_params(key, input_size, hidden_size, latent_size):
    """Deterministic init mimicking nn.Linear (uniform +-1/sqrt(fan_in)).
    Weights stored transposed: (in_features, out_features). Biases 2-D (1, out)."""
    def linear(k, fan_in, fan_out):
        kw, kb = jax.random.split(k)
        bound = 1.0 / (fan_in ** 0.5)
        w = jax.random.uniform(kw, (fan_in, fan_out), jnp.float32, -bound, bound)
        b = jax.random.uniform(kb, (1, fan_out), jnp.float32, -bound, bound)
        return w, b

    ks = jax.random.split(key, 6)
    w1, b1 = linear(ks[0], input_size, hidden_size)
    w21, b21 = linear(ks[1], hidden_size, latent_size)
    w22, b22 = linear(ks[2], hidden_size, latent_size)
    w3, b3 = linear(ks[3], latent_size, hidden_size)
    w41, b41 = linear(ks[4], hidden_size, input_size)
    w42, b42 = linear(ks[5], hidden_size, input_size)
    return (w1, b1, w21, b21, w22, b22, w3, b3, w41, b41, w42, b42)


def vae_forward_ref(x, eps, params):
    """Pure-JAX f32 reference (unfused weights), matching the PyTorch module."""
    (w1, b1, w21, b21, w22, b22, w3, b3, w41, b41, w42, b42) = params
    h1 = jnp.tanh(x @ w1 + b1)
    z_mean = h1 @ w21 + b21
    z_logvar = h1 @ w22 + b22
    z = z_mean + jnp.exp(0.5 * z_logvar) * eps
    h3 = jnp.tanh(z @ w3 + b3)
    dec_mean = jax.nn.sigmoid(h3 @ w41 + b41)
    dec_logvar = h3 @ w42 + b42
    return z_mean, z_logvar, dec_mean, dec_logvar


if __name__ == "__main__":
    input_size, hidden_size, latent_size = 16, 32, 8
    batch = 8

    key = jax.random.PRNGKey(0)
    k_x, k_eps, k_params = jax.random.split(key, 3)

    x = jax.random.normal(k_x, (batch, input_size), jnp.float32)
    # epsilon for reparameterize (the torch.randn_like draw), generated in glue code
    eps = jax.random.normal(k_eps, (batch, latent_size), jnp.float32)
    params = init_params(k_params, input_size, hidden_size, latent_size)
    packed = pack_params(params)   # fuse heads / cast to bf16 ONCE, outside the kernel

    out = vae_forward(x, eps, packed)
    out = jax.block_until_ready(out)

    ref = vae_forward_ref(x, eps, params)
    names = ("z_mean", "z_logvar", "dec_mean", "dec_logvar")
    for name, o, r in zip(names, out, ref):
        assert o.shape == r.shape, f"shape mismatch in {name}"
        # bf16 MXU inputs (f32 accumulate) -> loosened tolerance vs f32 reference
        assert jnp.allclose(o, r, atol=5e-2, rtol=5e-2), f"mismatch in {name}"

    print("KERNEL_OK")
</pallas_src>

<mosaic_0001>
module attributes {stable_mosaic.version = 11 : i64} {
  func.func @vae_kernel(%arg0: i32, %arg1: memref<8x16xf32, #tpu.memory_space<vmem>>, %arg2: memref<8x8xf32, #tpu.memory_space<vmem>>, %arg3: memref<16x32xbf16, #tpu.memory_space<vmem>>, %arg4: memref<32x16xbf16, #tpu.memory_space<vmem>>, %arg5: memref<8x32xbf16, #tpu.memory_space<vmem>>, %arg6: memref<32x32xbf16, #tpu.memory_space<vmem>>, %arg7: memref<1x112xf32, #tpu.memory_space<vmem>>, %arg8: memref<8x48xf32, #tpu.memory_space<vmem>>) attributes {dimension_semantics = [#tpu.dimension_semantics<parallel>], iteration_bounds = array<i64: 1>, scalar_prefetch = 0 : i64, scratch_operands = 0 : i64, tpu.core_type = #tpu.core_type<tc>, window_params = [{transform_indices = @transform_0, window_bounds = array<i64: 8, 16>}, {transform_indices = @transform_1, window_bounds = array<i64: 8, 8>}, {pipeline_mode = #tpu.pipeline_mode<synchronous>, transform_indices = @transform_2, window_bounds = array<i64: 16, 32>}, {pipeline_mode = #tpu.pipeline_mode<synchronous>, transform_indices = @transform_3, window_bounds = array<i64: 32, 16>}, {pipeline_mode = #tpu.pipeline_mode<synchronous>, transform_indices = @transform_4, window_bounds = array<i64: 8, 32>}, {pipeline_mode = #tpu.pipeline_mode<synchronous>, transform_indices = @transform_5, window_bounds = array<i64: 32, 32>}, {pipeline_mode = #tpu.pipeline_mode<synchronous>, transform_indices = @transform_6, window_bounds = array<i64: 1, 112>}, {transform_indices = @transform_7, window_bounds = array<i64: 8, 48>}]} {
    %c0 = arith.constant 0 : index
    %c0_0 = arith.constant 0 : index
    %0 = vector.load %arg1[%c0, %c0_0] : memref<8x16xf32, #tpu.memory_space<vmem>>, vector<8x16xf32>
    %c0_1 = arith.constant 0 : index
    %c0_2 = arith.constant 0 : index
    %1 = vector.load %arg2[%c0_1, %c0_2] : memref<8x8xf32, #tpu.memory_space<vmem>>, vector<8x8xf32>
    %c0_3 = arith.constant 0 : index
    %c0_4 = arith.constant 0 : index
    %2 = vector.load %arg7[%c0_3, %c0_4] : memref<1x112xf32, #tpu.memory_space<vmem>>, vector<1x112xf32>
    %3 = vector.extract_strided_slice %2 {offsets = [0, 0], sizes = [1, 32], strides = [1, 1]} : vector<1x112xf32> to vector<1x32xf32>
    %4 = vector.extract_strided_slice %2 {offsets = [0, 32], sizes = [1, 16], strides = [1, 1]} : vector<1x112xf32> to vector<1x16xf32>
    %5 = vector.extract_strided_slice %2 {offsets = [0, 48], sizes = [1, 32], strides = [1, 1]} : vector<1x112xf32> to vector<1x32xf32>
    %6 = vector.extract_strided_slice %2 {offsets = [0, 80], sizes = [1, 32], strides = [1, 1]} : vector<1x112xf32> to vector<1x32xf32>
    %7 = arith.truncf %0 : vector<8x16xf32> to vector<8x16xbf16>
    %c0_5 = arith.constant 0 : index
    %c0_6 = arith.constant 0 : index
    %8 = vector.load %arg3[%c0_5, %c0_6] : memref<16x32xbf16, #tpu.memory_space<vmem>>, vector<16x32xbf16>
    %cst = arith.constant dense<0.000000e+00> : vector<8x32xf32>
    %9 = tpu.matmul %7, %8, %cst {dimension_numbers = #tpu.dot_dimension_numbers<[1], [0], [0], [1], [0, 0, 1, 1], [], []>} : vector<8x16xbf16>, vector<16x32xbf16>, vector<8x32xf32> -> vector<8x32xf32>
    %10 = vector.broadcast %3 : vector<1x32xf32> to vector<8x32xf32>
    %11 = arith.addf %9, %10 : vector<8x32xf32>
    %12 = math.tanh %11 : vector<8x32xf32>
    %13 = arith.truncf %12 : vector<8x32xf32> to vector<8x32xbf16>
    %c0_7 = arith.constant 0 : index
    %c0_8 = arith.constant 0 : index
    %14 = vector.load %arg4[%c0_7, %c0_8] : memref<32x16xbf16, #tpu.memory_space<vmem>>, vector<32x16xbf16>
    %cst_9 = arith.constant dense<0.000000e+00> : vector<8x16xf32>
    %15 = tpu.matmul %13, %14, %cst_9 {dimension_numbers = #tpu.dot_dimension_numbers<[1], [0], [0], [1], [0, 0, 1, 1], [], []>} : vector<8x32xbf16>, vector<32x16xbf16>, vector<8x16xf32> -> vector<8x16xf32>
    %16 = vector.broadcast %4 : vector<1x16xf32> to vector<8x16xf32>
    %17 = arith.addf %15, %16 : vector<8x16xf32>
    %18 = vector.extract_strided_slice %17 {offsets = [0, 0], sizes = [8, 8], strides = [1, 1]} : vector<8x16xf32> to vector<8x8xf32>
    %19 = vector.extract_strided_slice %17 {offsets = [0, 8], sizes = [8, 8], strides = [1, 1]} : vector<8x16xf32> to vector<8x8xf32>
    %cst_10 = arith.constant 5.000000e-01 : f32
    %20 = vector.broadcast %cst_10 : f32 to vector<8x8xf32>
    %21 = arith.mulf %20, %19 : vector<8x8xf32>
    %22 = math.exp %21 : vector<8x8xf32>
    %23 = arith.mulf %22, %1 : vector<8x8xf32>
    %24 = arith.addf %18, %23 : vector<8x8xf32>
    %25 = arith.truncf %24 : vector<8x8xf32> to vector<8x8xbf16>
    %c0_11 = arith.constant 0 : index
    %c0_12 = arith.constant 0 : index
    %26 = vector.load %arg5[%c0_11, %c0_12] : memref<8x32xbf16, #tpu.memory_space<vmem>>, vector<8x32xbf16>
    %cst_13 = arith.constant dense<0.000000e+00> : vector<8x32xf32>
    %27 = tpu.matmul %25, %26, %cst_13 {dimension_numbers = #tpu.dot_dimension_numbers<[1], [0], [0], [1], [0, 0, 1, 1], [], []>} : vector<8x8xbf16>, vector<8x32xbf16>, vector<8x32xf32> -> vector<8x32xf32>
    %28 = vector.broadcast %5 : vector<1x32xf32> to vector<8x32xf32>
    %29 = arith.addf %27, %28 : vector<8x32xf32>
    %30 = math.tanh %29 : vector<8x32xf32>
    %31 = arith.truncf %30 : vector<8x32xf32> to vector<8x32xbf16>
    %c0_14 = arith.constant 0 : index
    %c0_15 = arith.constant 0 : index
    %32 = vector.load %arg6[%c0_14, %c0_15] : memref<32x32xbf16, #tpu.memory_space<vmem>>, vector<32x32xbf16>
    %cst_16 = arith.constant dense<0.000000e+00> : vector<8x32xf32>
    %33 = tpu.matmul %31, %32, %cst_16 {dimension_numbers = #tpu.dot_dimension_numbers<[1], [0], [0], [1], [0, 0, 1, 1], [], []>} : vector<8x32xbf16>, vector<32x32xbf16>, vector<8x32xf32> -> vector<8x32xf32>
    %34 = vector.broadcast %6 : vector<1x32xf32> to vector<8x32xf32>
    %35 = arith.addf %33, %34 : vector<8x32xf32>
    %36 = vector.extract_strided_slice %35 {offsets = [0, 0], sizes = [8, 16], strides = [1, 1]} : vector<8x32xf32> to vector<8x16xf32>
    %cst_17 = arith.constant 5.000000e-01 : f32
    %37 = vector.broadcast %cst_17 : f32 to vector<8x16xf32>
    %38 = arith.mulf %37, %36 : vector<8x16xf32>
    %39 = math.tanh %38 : vector<8x16xf32>
    %cst_18 = arith.constant 1.000000e+00 : f32
    %40 = vector.broadcast %cst_18 : f32 to vector<8x16xf32>
    %41 = arith.addf %39, %40 : vector<8x16xf32>
    %cst_19 = arith.constant 5.000000e-01 : f32
    %42 = vector.broadcast %cst_19 : f32 to vector<8x16xf32>
    %43 = arith.mulf %42, %41 : vector<8x16xf32>
    %44 = vector.extract_strided_slice %35 {offsets = [0, 16], sizes = [8, 16], strides = [1, 1]} : vector<8x32xf32> to vector<8x16xf32>
    %45 = tpu.concatenate %17, %43, %44 in 1 : vector<8x16xf32>, vector<8x16xf32>, vector<8x16xf32> -> vector<8x48xf32>
    %c0_20 = arith.constant 0 : index
    %c0_21 = arith.constant 0 : index
    %46 = vector.load %arg8[%c0_20, %c0_21] : memref<8x48xf32, #tpu.memory_space<vmem>>, vector<8x48xf32>
    tpu.vector_store %arg8[%c0_20, %c0_21], %45 {strides = array<i32>} : memref<8x48xf32, #tpu.memory_space<vmem>>, vector<8x48xf32>,
    return
  }
  func.func @transform_0(%arg0: i32) -> (i32, i32) {
    %c0_i32 = arith.constant 0 : i32
    %c0_i32_0 = arith.constant 0 : i32
    return %arg0, %c0_i32 : i32, i32
  }
  func.func @transform_1(%arg0: i32) -> (i32, i32) {
    %c0_i32 = arith.constant 0 : i32
    %c0_i32_0 = arith.constant 0 : i32
    return %arg0, %c0_i32 : i32, i32
  }
  func.func @transform_2(%arg0: i32) -> (i32, i32) {
    %c0_i32 = arith.constant 0 : i32
    %c0_i32_0 = arith.constant 0 : i32
    %c0_i32_1 = arith.constant 0 : i32
    return %c0_i32, %c0_i32_0 : i32, i32
  }
  func.func @transform_3(%arg0: i32) -> (i32, i32) {
    %c0_i32 = arith.constant 0 : i32
    %c0_i32_0 = arith.constant 0 : i32
    %c0_i32_1 = arith.constant 0 : i32
    return %c0_i32, %c0_i32_0 : i32, i32
  }
  func.func @transform_4(%arg0: i32) -> (i32, i32) {
    %c0_i32 = arith.constant 0 : i32
    %c0_i32_0 = arith.constant 0 : i32
    %c0_i32_1 = arith.constant 0 : i32
    return %c0_i32, %c0_i32_0 : i32, i32
  }
  func.func @transform_5(%arg0: i32) -> (i32, i32) {
    %c0_i32 = arith.constant 0 : i32
    %c0_i32_0 = arith.constant 0 : i32
    %c0_i32_1 = arith.constant 0 : i32
    return %c0_i32, %c0_i32_0 : i32, i32
  }
  func.func @transform_6(%arg0: i32) -> (i32, i32) {
    %c0_i32 = arith.constant 0 : i32
    %c0_i32_0 = arith.constant 0 : i32
    %c0_i32_1 = arith.constant 0 : i32
    return %c0_i32, %c0_i32_0 : i32, i32
  }
  func.func @transform_7(%arg0: i32) -> (i32, i32) {
    %c0_i32 = arith.constant 0 : i32
    %c0_i32_0 = arith.constant 0 : i32
    return %arg0, %c0_i32 : i32, i32
  }
}

module attributes {stable_mosaic.version = 11 : i64} {
  func.func @vae_kernel(%arg0: i32, %arg1: memref<8x16xf32, #tpu.memory_space<vmem>>, %arg2: memref<8x8xf32, #tpu.memory_space<vmem>>, %arg3: memref<16x32xbf16, #tpu.memory_space<vmem>>, %arg4: memref<32x16xbf16, #tpu.memory_space<vmem>>, %arg5: memref<8x32xbf16, #tpu.memory_space<vmem>>, %arg6: memref<32x32xbf16, #tpu.memory_space<vmem>>, %arg7: memref<1x112xf32, #tpu.memory_space<vmem>>, %arg8: memref<8x48xf32, #tpu.memory_space<vmem>>) attributes {dimension_semantics = [#tpu.dimension_semantics<parallel>], iteration_bounds = array<i64: 1>, scalar_prefetch = 0 : i64, scratch_operands = 0 : i64, tpu.core_type = #tpu.core_type<tc>, window_params = [{transform_indices = @transform_0, window_bounds = array<i64: 8, 16>}, {transform_indices = @transform_1, window_bounds = array<i64: 8, 8>}, {pipeline_mode = #tpu.pipeline_mode<synchronous>, transform_indices = @transform_2, window_bounds = array<i64: 16, 32>}, {pipeline_mode = #tpu.pipeline_mode<synchronous>, transform_indices = @transform_3, window_bounds = array<i64: 32, 16>}, {pipeline_mode = #tpu.pipeline_mode<synchronous>, transform_indices = @transform_4, window_bounds = array<i64: 8, 32>}, {pipeline_mode = #tpu.pipeline_mode<synchronous>, transform_indices = @transform_5, window_bounds = array<i64: 32, 32>}, {pipeline_mode = #tpu.pipeline_mode<synchronous>, transform_indices = @transform_6, window_bounds = array<i64: 1, 112>}, {transform_indices = @transform_7, window_bounds = array<i64: 8, 48>}]} {
    %c0 = arith.constant 0 : index
    %c0_0 = arith.constant 0 : index
    %0 = vector.load %arg1[%c0, %c0_0] : memref<8x16xf32, #tpu.memory_space<vmem>>, vector<8x16xf32>
    %c0_1 = arith.constant 0 : index
    %c0_2 = arith.constant 0 : index
    %1 = vector.load %arg2[%c0_1, %c0_2] : memref<8x8xf32, #tpu.memory_space<vmem>>, vector<8x8xf32>
    %c0_3 = arith.constant 0 : index
    %c0_4 = arith.constant 0 : index
    %2 = vector.load %arg7[%c0_3, %c0_4] : memref<1x112xf32, #tpu.memory_space<vmem>>, vector<1x112xf32>
    %3 = vector.extract_strided_slice %2 {offsets = [0, 0], sizes = [1, 32], strides = [1, 1]} : vector<1x112xf32> to vector<1x32xf32>
    %4 = vector.extract_strided_slice %2 {offsets = [0, 32], sizes = [1, 16], strides = [1, 1]} : vector<1x112xf32> to vector<1x16xf32>
    %5 = vector.extract_strided_slice %2 {offsets = [0, 48], sizes = [1, 32], strides = [1, 1]} : vector<1x112xf32> to vector<1x32xf32>
    %6 = vector.extract_strided_slice %2 {offsets = [0, 80], sizes = [1, 32], strides = [1, 1]} : vector<1x112xf32> to vector<1x32xf32>
    %7 = arith.truncf %0 : vector<8x16xf32> to vector<8x16xbf16>
    %c0_5 = arith.constant 0 : index
    %c0_6 = arith.constant 0 : index
    %8 = vector.load %arg3[%c0_5, %c0_6] : memref<16x32xbf16, #tpu.memory_space<vmem>>, vector<16x32xbf16>
    %cst = arith.constant dense<0.000000e+00> : vector<8x32xf32>
    %9 = tpu.matmul %7, %8, %cst {dimension_numbers = #tpu.dot_dimension_numbers<[1], [0], [0], [1], [0, 0, 1, 1], [], []>} : vector<8x16xbf16>, vector<16x32xbf16>, vector<8x32xf32> -> vector<8x32xf32>
    %10 = vector.broadcast %3 : vector<1x32xf32> to vector<8x32xf32>
    %11 = arith.addf %9, %10 : vector<8x32xf32>
    %12 = math.tanh %11 : vector<8x32xf32>
    %13 = arith.truncf %12 : vector<8x32xf32> to vector<8x32xbf16>
    %c0_7 = arith.constant 0 : index
    %c0_8 = arith.constant 0 : index
    %14 = vector.load %arg4[%c0_7, %c0_8] : memref<32x16xbf16, #tpu.memory_space<vmem>>, vector<32x16xbf16>
    %cst_9 = arith.constant dense<0.000000e+00> : vector<8x16xf32>
    %15 = tpu.matmul %13, %14, %cst_9 {dimension_numbers = #tpu.dot_dimension_numbers<[1], [0], [0], [1], [0, 0, 1, 1], [], []>} : vector<8x32xbf16>, vector<32x16xbf16>, vector<8x16xf32> -> vector<8x16xf32>
    %16 = vector.broadcast %4 : vector<1x16xf32> to vector<8x16xf32>
    %17 = arith.addf %15, %16 : vector<8x16xf32>
    %18 = vector.extract_strided_slice %17 {offsets = [0, 0], sizes = [8, 8], strides = [1, 1]} : vector<8x16xf32> to vector<8x8xf32>
    %19 = vector.extract_strided_slice %17 {offsets = [0, 8], sizes = [8, 8], strides = [1, 1]} : vector<8x16xf32> to vector<8x8xf32>
    %cst_10 = arith.constant 5.000000e-01 : f32
    %20 = vector.broadcast %cst_10 : f32 to vector<8x8xf32>
    %21 = arith.mulf %20, %19 : vector<8x8xf32>
    %22 = math.exp %21 : vector<8x8xf32>
    %23 = arith.mulf %22, %1 : vector<8x8xf32>
    %24 = arith.addf %18, %23 : vector<8x8xf32>
    %25 = arith.truncf %24 : vector<8x8xf32> to vector<8x8xbf16>
    %c0_11 = arith.constant 0 : index
    %c0_12 = arith.constant 0 : index
    %26 = vector.load %arg5[%c0_11, %c0_12] : memref<8x32xbf16, #tpu.memory_space<vmem>>, vector<8x32xbf16>
    %cst_13 = arith.constant dense<0.000000e+00> : vector<8x32xf32>
    %27 = tpu.matmul %25, %26, %cst_13 {dimension_numbers = #tpu.dot_dimension_numbers<[1], [0], [0], [1], [0, 0, 1, 1], [], []>} : vector<8x8xbf16>, vector<8x32xbf16>, vector<8x32xf32> -> vector<8x32xf32>
    %28 = vector.broadcast %5 : vector<1x32xf32> to vector<8x32xf32>
    %29 = arith.addf %27, %28 : vector<8x32xf32>
    %30 = math.tanh %29 : vector<8x32xf32>
    %31 = arith.truncf %30 : vector<8x32xf32> to vector<8x32xbf16>
    %c0_14 = arith.constant 0 : index
    %c0_15 = arith.constant 0 : index
    %32 = vector.load %arg6[%c0_14, %c0_15] : memref<32x32xbf16, #tpu.memory_space<vmem>>, vector<32x32xbf16>
    %cst_16 = arith.constant dense<0.000000e+00> : vector<8x32xf32>
    %33 = tpu.matmul %31, %32, %cst_16 {dimension_numbers = #tpu.dot_dimension_numbers<[1], [0], [0], [1], [0, 0, 1, 1], [], []>} : vector<8x32xbf16>, vector<32x32xbf16>, vector<8x32xf32> -> vector<8x32xf32>
    %34 = vector.broadcast %6 : vector<1x32xf32> to vector<8x32xf32>
    %35 = arith.addf %33, %34 : vector<8x32xf32>
    %36 = vector.extract_strided_slice %35 {offsets = [0, 0], sizes = [8, 16], strides = [1, 1]} : vector<8x32xf32> to vector<8x16xf32>
    %cst_17 = arith.constant 5.000000e-01 : f32
    %37 = vector.broadcast %cst_17 : f32 to vector<8x16xf32>
    %38 = arith.mulf %37, %36 : vector<8x16xf32>
    %39 = math.tanh %38 : vector<8x16xf32>
    %cst_18 = arith.constant 1.000000e+00 : f32
    %40 = vector.broadcast %cst_18 : f32 to vector<8x16xf32>
    %41 = arith.addf %39, %40 : vector<8x16xf32>
    %cst_19 = arith.constant 5.000000e-01 : f32
    %42 = vector.broadcast %cst_19 : f32 to vector<8x16xf32>
    %43 = arith.mulf %42, %41 : vector<8x16xf32>
    %44 = vector.extract_strided_slice %35 {offsets = [0, 16], sizes = [8, 16], strides = [1, 1]} : vector<8x32xf32> to vector<8x16xf32>
    %45 = tpu.concatenate %17, %43, %44 in 1 : vector<8x16xf32>, vector<8x16xf32>, vector<8x16xf32> -> vector<8x48xf32>
    %c0_20 = arith.constant 0 : index
    %c0_21 = arith.constant 0 : index
    %46 = vector.load %arg8[%c0_20, %c0_21] : memref<8x48xf32, #tpu.memory_space<vmem>>, vector<8x48xf32>
    tpu.vector_store %arg8[%c0_20, %c0_21], %45 {strides = array<i32>} : memref<8x48xf32, #tpu.memory_space<vmem>>, vector<8x48xf32>,
    return
  }
  func.func @transform_0(%arg0: i32) -> (i32, i32) {
    %c0_i32 = arith.constant 0 : i32
    %c0_i32_0 = arith.constant 0 : i32
    return %arg0, %c0_i32 : i32, i32
  }
  func.func @transform_1(%arg0: i32) -> (i32, i32) {
    %c0_i32 = arith.constant 0 : i32
    %c0_i32_0 = arith.constant 0 : i32
    return %arg0, %c0_i32 : i32, i32
  }
  func.func @transform_2(%arg0: i32) -> (i32, i32) {
    %c0_i32 = arith.constant 0 : i32
    %c0_i32_0 = arith.constant 0 : i32
    %c0_i32_1 = arith.constant 0 : i32
    return %c0_i32, %c0_i32_0 : i32, i32
  }
  func.func @transform_3(%arg0: i32) -> (i32, i32) {
    %c0_i32 = arith.constant 0 : i32
    %c0_i32_0 = arith.constant 0 : i32
    %c0_i32_1 = arith.constant 0 : i32
    return %c0_i32, %c0_i32_0 : i32, i32
  }
  func.func @transform_4(%arg0: i32) -> (i32, i32) {
    %c0_i32 = arith.constant 0 : i32
    %c0_i32_0 = arith.constant 0 : i32
    %c0_i32_1 = arith.constant 0 : i32
    return %c0_i32, %c0_i32_0 : i32, i32
  }
  func.func @transform_5(%arg0: i32) -> (i32, i32) {
    %c0_i32 = arith.constant 0 : i32
    %c0_i32_0 = arith.constant 0 : i32
    %c0_i32_1 = arith.constant 0 : i32
    return %c0_i32, %c0_i32_0 : i32, i32
  }
  func.func @transform_6(%arg0: i32) -> (i32, i32) {
    %c0_i32 = arith.constant 0 : i32
    %c0_i32_0 = arith.constant 0 : i32
    %c0_i32_1 = arith.constant 0 : i32
    return %c0_i32, %c0_i32_0 : i32, i32
  }
  func.func @transform_7(%arg0: i32) -> (i32, i32) {
    %c0_i32 = arith.constant 0 : i32
    %c0_i32_0 = arith.constant 0 : i32
    return %arg0, %c0_i32 : i32, i32
  }
}

</mosaic_0001>

<llo_original>
// kernel: tpu_custom_call.1
$region0: #{tpu_custom_call.1}
  #allocation0 [shape = 'u32[]', space=smem, size = 0x4, offset = 0x4, fixed_abs, tag = 'smem constant byte address 0x4 - core index']
  #allocation1 [shape = 'u32[144,128]{1,0:T(1,128)}', space=vmem, size = 0x12000, scoped, tag = 'internal scratch']
  %s0 = inlined_call_operand.vmem [shape: f32[8,16], index: 0, kind: input, shape index: {}]
  %s1 = inlined_call_operand.hbm [shape: f32[8,8], index: 1, kind: input, shape index: {}]
  %s2 = inlined_call_operand.hbm [shape: bf16[16,32], index: 2, kind: input, shape index: {}]
  %s3 = inlined_call_operand.vmem [shape: bf16[32,16], index: 3, kind: input, shape index: {}]
  %s4 = inlined_call_operand.vmem [shape: bf16[8,32], index: 4, kind: input, shape index: {}]
  %s5 = inlined_call_operand.vmem [shape: bf16[32,32], index: 5, kind: input, shape index: {}]
  %s6 = inlined_call_operand.vmem [shape: f32[1,112], index: 6, kind: input, shape index: {}]
  %s7 = inlined_call_operand.hbm [shape: f32[8,48], index: 7, kind: output, shape index: {}]
  %s8 = sld [smem:[#allocation0]]
  $region46: #{tpu_custom_call.1} parent=0
    _
  %s10 = ssub.s32 1, %s8
  %s11 = scalar_select 0, %s10, %s8
  $region1: #{tpu_custom_call.1} parent=0
    #allocation2 [shape = 'u8[4096]{0}', space=vmem, size = 0x1000, scoped, tag = 'input window, operand 1, single buffered']
    #allocation3 [shape = 's32[1]{0}', space=sflag, size = 0x4, scoped, tag = 'scoped memory for tpu_custom_call.1']
    #allocation4 [shape = 's32[1]{0}', space=sflag, size = 0x4, scoped, tag = 'scoped memory for tpu_custom_call.1']
    #allocation5 [shape = 'u8[4096]{0}', space=vmem, size = 0x1000, scoped, tag = 'input window, operand 2, single buffered']
    #allocation6 [shape = 's32[1]{0}', space=sflag, size = 0x4, scoped, tag = 'scoped memory for tpu_custom_call.1']
    #allocation7 [shape = 'u8[4096]{0}', space=vmem, size = 0x1000, scoped, tag = 'output window, operand 0, single buffered']
    %12 = vsyncpa [#allocation3], 0
    %13 = vsyncpa [#allocation6], 0
    %14 = vsyncpa [#allocation4], 0
    // Predicated region
    $region2: #{tpu_custom_call.1} parent=1 // pred_check
      _
    $region3: #{tpu_custom_call.1} parent=1 // pred_check_branch
      %16 = sbr.rel (0) target = $region5
    $region4: #{tpu_custom_call.1} parent=1 // pred_region
      _
    $region5: #{tpu_custom_call.1} parent=1 // pred_fallthru
      _
    // Predicated region
    $region6: #{tpu_custom_call.1} parent=1 // pred_check
      _
    $region7: #{tpu_custom_call.1} parent=1 // pred_check_branch
      %18 = sbr.rel (0) target = $region9
    $region8: #{tpu_custom_call.1} parent=1 // pred_region
      %s20 = ssub.s32 128, 128
      %21 = vsyncadd [#allocation3], %s20
      %s23 = sshll.u32 [#allocation2], 4
      %s24 = int_to_ptr.vmem [resolvable:$true] %s23
      %26 = dma.hbm_to_vmem [thread:$0]  %s1, 128, %s24, [#allocation3]
    $region9: #{tpu_custom_call.1} parent=1 // pred_fallthru
      _
    // Predicated region
    $region10: #{tpu_custom_call.1} parent=1 // pred_check
      _
    $region11: #{tpu_custom_call.1} parent=1 // pred_check_branch
      %28 = sbr.rel (0) target = $region13
    $region12: #{tpu_custom_call.1} parent=1 // pred_region
      %s30 = ssub.s32 128, 128
      %31 = vsyncadd [#allocation6], %s30
      %s32 = sshll.u32 [#allocation5], 4
      %s33 = int_to_ptr.vmem [resolvable:$true] %s32
      %38 = dma.hbm_to_vmem [thread:$0]  %s2, 128, %s33, [#allocation6], 64, 64, 4
    $region13: #{tpu_custom_call.1} parent=1 // pred_fallthru
      _
    // Predicated region
    $region14: #{tpu_custom_call.1} parent=1 // pred_check
      _
    $region15: #{tpu_custom_call.1} parent=1 // pred_check_branch
      %40 = sbr.rel (0) target = $region17
    $region16: #{tpu_custom_call.1} parent=1 // pred_region
      _
    $region17: #{tpu_custom_call.1} parent=1 // pred_fallthru
      _
    // Predicated region
    $region18: #{tpu_custom_call.1} parent=1 // pred_check
      _
    $region19: #{tpu_custom_call.1} parent=1 // pred_check_branch
      %42 = sbr.rel (0) target = $region21
    $region20: #{tpu_custom_call.1} parent=1 // pred_region
      _
    $region21: #{tpu_custom_call.1} parent=1 // pred_fallthru
      _
    // Predicated region
    $region22: #{tpu_custom_call.1} parent=1 // pred_check
      _
    $region23: #{tpu_custom_call.1} parent=1 // pred_check_branch
      %44 = sbr.rel (0) target = $region25
    $region24: #{tpu_custom_call.1} parent=1 // pred_region
      _
    $region25: #{tpu_custom_call.1} parent=1 // pred_fallthru
      _
    // Predicated region
    $region26: #{tpu_custom_call.1} parent=1 // pred_check
      _
    $region27: #{tpu_custom_call.1} parent=1 // pred_check_branch
      %46 = sbr.rel (0) target = $region29
    $region28: #{tpu_custom_call.1} parent=1 // pred_region
      _
    $region29: #{tpu_custom_call.1} parent=1 // pred_fallthru
      _
    // Predicated region
    $region30: #{tpu_custom_call.1} parent=1 // pred_check
      _
    $region31: #{tpu_custom_call.1} parent=1 // pred_check_branch
      %48 = sbr.rel (0) target = $region33
    $region32: #{tpu_custom_call.1} parent=1 // pred_region
      %49 = dma.done [#allocation3], 128
    $region33: #{tpu_custom_call.1} parent=1 // pred_fallthru
      _
    // Predicated region
    $region34: #{tpu_custom_call.1} parent=1 // pred_check
      _
    $region35: #{tpu_custom_call.1} parent=1 // pred_check_branch
      %51 = sbr.rel (0) target = $region37
    $region36: #{tpu_custom_call.1} parent=1 // pred_region
      %52 = dma.done [#allocation6], 128
    $region37: #{tpu_custom_call.1} parent=1 // pred_fallthru
      _
    %v54 = vld [vmem:[%s0] sm:$0xff]
    %v55 = vld [vmem:[#allocation2] sm:$0xff]
    %v56 = vld [vmem:[%s6] sm:$0x1]
    %v57 = vpack.c.bf16 %v54, %v54
    %v58 = vld [vmem:[#allocation5] sm:$0xf]
    %v59 = vld [vmem:[#allocation5 + $0x4] sm:$0xf]
    %v61 = vlaneseq
    %v62 = vshrl.u32 %v61, 7
    %v63 = vsub.s32 0, %v62
    %v64 = vrot.slane %v56, %v63
    %v68 = vunpack.c.l.b16 %v58
    %v69 = vunpack.c.l.b16 %v59
    %v70 = vpack.c.b16 %v69, %v68
    %vm72 = vcmask 130048
    %v74 = vsel %vm72, %v57, 0
    %76 = vmatprep.subr.bf16.mxu0 0
    %77 = vmatpush1.bf16.msra.mxu0 %v70
    %78 = vmatprep.subr.bf16.mxu0 0
    %79 = vmatpush1.bf16.msra.mxu0 0
    %80 = vmatprep.subr.bf16.mxu0 0
    %81 = vmatpush1.bf16.msra.mxu0 0
    %82 = vmatprep.subr.bf16.mxu0 0
    %83 = vmatpush1.bf16.msra.mxu0 0
    %84 = vmatprep.subr.bf16.mxu0 0
    %85 = vmatpush1.bf16.msra.mxu0 0
    %86 = vmatprep.subr.bf16.mxu0 0
    %87 = vmatpush1.bf16.msra.mxu0 0
    %88 = vmatprep.subr.bf16.mxu0 0
    %89 = vmatpush1.bf16.msra.mxu0 0
    %90 = vmatprep.subr.bf16.mxu0 0
    %91 = vmatpush1.bf16.msra.mxu0 0
    %92 = vmatprep.subr.bf16.mxu0 0
    %93 = vmatpush1.bf16.msra.mxu0 0
    %94 = vmatprep.subr.bf16.mxu0 0
    %95 = vmatpush1.bf16.msra.mxu0 0
    %96 = vmatprep.subr.bf16.mxu0 0
    %97 = vmatpush1.bf16.msra.mxu0 0
    %98 = vmatprep.subr.bf16.mxu0 0
    %99 = vmatpush1.bf16.msra.mxu0 0
    %100 = vmatprep.subr.bf16.mxu0 0
    %101 = vmatpush1.bf16.msra.mxu0 0
    %102 = vmatprep.subr.bf16.mxu0 0
    %103 = vmatpush1.bf16.msra.mxu0 0
    %104 = vmatprep.subr.bf16.mxu0 0
    %105 = vmatpush1.bf16.msra.mxu0 0
    %106 = vmatprep.subr.bf16.mxu0 0
    %107 = vmatpush1.bf16.msra.mxu0 0
    %108 = vmatprep.mubr.bf16.mxu0 0
    %109 = vmatmul.mubr.bf16.gmra.mrb[0].mxu0 %v74
    %v110 = vpop.f32.mrb[0].mxu0
    %v111 = vadd.f32 %v64, %v110
    %v112 = vpop.f32.mrb[0].mxu0
    %v113 = vpop.f32.mrb[0].mxu0
    %v114 = vpop.f32.mrb[0].mxu0
    %115 = vdwg.mxu0
    %v116 = vtanh.pop %v111
    %v117 = vpack.c.bf16 %v116, %v116
    %v118 = vld [vmem:[%s3] sm:$0xf]
    %v119 = vld [vmem:[%s3 + $0x4] sm:$0xf]
    %v120 = vld [vmem:[%s3 + $0x8] sm:$0xf]
    %v121 = vld [vmem:[%s3 + $0xc] sm:$0xf]
    %v126 = vunpack.c.l.b16 %v118
    %v127 = vunpack.c.l.b16 %v119
    %v128 = vunpack.c.l.b16 %v120
    %v129 = vunpack.c.l.b16 %v121
    %v130 = vpack.c.b16 %v127, %v126
    %v131 = vpack.c.b16 %v129, %v128
    %134 = vrot.lane.b32.xlu0 %v64, 96
    %v135 = vpop.permute.xlu0 %134
    %vm137 = vcmask 261120
    %v139 = vsel %vm137, %v117, 0
    %141 = vmatprep.subr.bf16.mxu0 0
    %142 = vmatpush1.bf16.msra.mxu0 %v130
    %143 = vmatprep.subr.bf16.mxu0 0
    %144 = vmatpush1.bf16.msra.mxu0 %v131
    %145 = vmatprep.subr.bf16.mxu0 0
    %146 = vmatpush1.bf16.msra.mxu0 0
    %147 = vmatprep.subr.bf16.mxu0 0
    %148 = vmatpush1.bf16.msra.mxu0 0
    %149 = vmatprep.subr.bf16.mxu0 0
    %150 = vmatpush1.bf16.msra.mxu0 0
    %151 = vmatprep.subr.bf16.mxu0 0
    %152 = vmatpush1.bf16.msra.mxu0 0
    %153 = vmatprep.subr.bf16.mxu0 0
    %154 = vmatpush1.bf16.msra.mxu0 0
    %155 = vmatprep.subr.bf16.mxu0 0
    %156 = vmatpush1.bf16.msra.mxu0 0
    %157 = vmatprep.subr.bf16.mxu0 0
    %158 = vmatpush1.bf16.msra.mxu0 0
    %159 = vmatprep.subr.bf16.mxu0 0
    %160 = vmatpush1.bf16.msra.mxu0 0
    %161 = vmatprep.subr.bf16.mxu0 0
    %162 = vmatpush1.bf16.msra.mxu0 0
    %163 = vmatprep.subr.bf16.mxu0 0
    %164 = vmatpush1.bf16.msra.mxu0 0
    %165 = vmatprep.subr.bf16.mxu0 0
    %166 = vmatpush1.bf16.msra.mxu0 0
    %167 = vmatprep.subr.bf16.mxu0 0
    %168 = vmatpush1.bf16.msra.mxu0 0
    %169 = vmatprep.subr.bf16.mxu0 0
    %170 = vmatpush1.bf16.msra.mxu0 0
    %171 = vmatprep.subr.bf16.mxu0 0
    %172 = vmatpush1.bf16.msra.mxu0 0
    %173 = vmatprep.mubr.bf16.mxu0 0
    %174 = vmatmul.mubr.bf16.gmra.mrb[0].mxu0 %v139
    %v175 = vpop.f32.mrb[0].mxu0
    %v176 = vadd.f32 %v135, %v175
    %v177 = vpop.f32.mrb[0].mxu0
    %v178 = vpop.f32.mrb[0].mxu0
    %v179 = vpop.f32.mrb[0].mxu0
    %180 = vdwg.mxu0
    %v181 = vmul.f32 %v176, 0.5
    %v182 = vmul.f32 %v181, 1.442695
    %v183 = vpow.pop %v182
    %185 = vrot.lane.b32.xlu0 %v55, 8
    %v186 = vpop.permute.xlu0 %185
    %v188 = vmul.f32 %v183, %v186
    %190 = vrot.lane.b32.xlu0 %v188, 120
    %v191 = vpop.permute.xlu0 %190
    %v193 = vadd.f32 %v176, %v191
    %v194 = vpack.c.bf16 %v193, %v193
    %v195 = vld [vmem:[%s4] sm:$0xf]
    %196 = vrot.lane.b32.xlu0 %v64, 80
    %v197 = vpop.permute.xlu0 %196
    %vm199 = vcmask 64512
    %v201 = vsel %vm199, %v194, 0
    %vm203 = vcmask 1043456
    %v205 = vsel %vm203, %v195, 0
    %207 = vmatprep.subr.bf16.mxu0 0
    %208 = vmatpush1.bf16.msra.mxu0 %v205
    %209 = vmatprep.subr.bf16.mxu0 0
    %210 = vmatpush1.bf16.msra.mxu0 0
    %211 = vmatprep.subr.bf16.mxu0 0
    %212 = vmatpush1.bf16.msra.mxu0 0
    %213 = vmatprep.subr.bf16.mxu0 0
    %214 = vmatpush1.bf16.msra.mxu0 0
    %215 = vmatprep.subr.bf16.mxu0 0
    %216 = vmatpush1.bf16.msra.mxu0 0
    %217 = vmatprep.subr.bf16.mxu0 0
    %218 = vmatpush1.bf16.msra.mxu0 0
    %219 = vmatprep.subr.bf16.mxu0 0
    %220 = vmatpush1.bf16.msra.mxu0 0
    %221 = vmatprep.subr.bf16.mxu0 0
    %222 = vmatpush1.bf16.msra.mxu0 0
    %223 = vmatprep.subr.bf16.mxu0 0
    %224 = vmatpush1.bf16.msra.mxu0 0
    %225 = vmatprep.subr.bf16.mxu0 0
    %226 = vmatpush1.bf16.msra.mxu0 0
    %227 = vmatprep.subr.bf16.mxu0 0
    %228 = vmatpush1.bf16.msra.mxu0 0
    %229 = vmatprep.subr.bf16.mxu0 0
    %230 = vmatpush1.bf16.msra.mxu0 0
    %231 = vmatprep.subr.bf16.mxu0 0
    %232 = vmatpush1.bf16.msra.mxu0 0
    %233 = vmatprep.subr.bf16.mxu0 0
    %234 = vmatpush1.bf16.msra.mxu0 0
    %235 = vmatprep.subr.bf16.mxu0 0
    %236 = vmatpush1.bf16.msra.mxu0 0
    %237 = vmatprep.subr.bf16.mxu0 0
    %238 = vmatpush1.bf16.msra.mxu0 0
    %239 = vmatprep.mubr.bf16.mxu0 0
    %240 = vmatmul.mubr.bf16.gmra.mrb[0].mxu0 %v201
    %v241 = vpop.f32.mrb[0].mxu0
    %v242 = vadd.f32 %v197, %v241
    %v243 = vpop.f32.mrb[0].mxu0
    %v244 = vpop.f32.mrb[0].mxu0
    %v245 = vpop.f32.mrb[0].mxu0
    %246 = vdwg.mxu0
    %v247 = vtanh.pop %v242
    %v248 = vpack.c.bf16 %v247, %v247
    %v249 = vld [vmem:[%s5] sm:$0xf]
    %v250 = vld [vmem:[%s5 + $0x4] sm:$0xf]
    %v251 = vld [vmem:[%s5 + $0x8] sm:$0xf]
    %v252 = vld [vmem:[%s5 + $0xc] sm:$0xf]
    %v257 = vunpack.c.l.b16 %v249
    %v258 = vunpack.c.l.b16 %v250
    %v259 = vunpack.c.l.b16 %v251
    %v260 = vunpack.c.l.b16 %v252
    %v261 = vpack.c.b16 %v258, %v257
    %v262 = vpack.c.b16 %v260, %v259
    %265 = vrot.lane.b32.xlu0 %v64, 48
    %v266 = vpop.permute.xlu0 %265
    %v269 = vsel %vm137, %v248, 0
    %271 = vmatprep.subr.bf16.mxu0 0
    %272 = vmatpush1.bf16.msra.mxu0 %v261
    %273 = vmatprep.subr.bf16.mxu0 0
    %274 = vmatpush1.bf16.msra.mxu0 %v262
    %275 = vmatprep.subr.bf16.mxu0 0
    %276 = vmatpush1.bf16.msra.mxu0 0
    %277 = vmatprep.subr.bf16.mxu0 0
    %278 = vmatpush1.bf16.msra.mxu0 0
    %279 = vmatprep.subr.bf16.mxu0 0
    %280 = vmatpush1.bf16.msra.mxu0 0
    %281 = vmatprep.subr.bf16.mxu0 0
    %282 = vmatpush1.bf16.msra.mxu0 0
    %283 = vmatprep.subr.bf16.mxu0 0
    %284 = vmatpush1.bf16.msra.mxu0 0
    %285 = vmatprep.subr.bf16.mxu0 0
    %286 = vmatpush1.bf16.msra.mxu0 0
    %287 = vmatprep.subr.bf16.mxu0 0
    %288 = vmatpush1.bf16.msra.mxu0 0
    %289 = vmatprep.subr.bf16.mxu0 0
    %290 = vmatpush1.bf16.msra.mxu0 0
    %291 = vmatprep.subr.bf16.mxu0 0
    %292 = vmatpush1.bf16.msra.mxu0 0
    %293 = vmatprep.subr.bf16.mxu0 0
    %294 = vmatpush1.bf16.msra.mxu0 0
    %295 = vmatprep.subr.bf16.mxu0 0
    %296 = vmatpush1.bf16.msra.mxu0 0
    %297 = vmatprep.subr.bf16.mxu0 0
    %298 = vmatpush1.bf16.msra.mxu0 0
    %299 = vmatprep.subr.bf16.mxu0 0
    %300 = vmatpush1.bf16.msra.mxu0 0
    %301 = vmatprep.subr.bf16.mxu0 0
    %302 = vmatpush1.bf16.msra.mxu0 0
    %303 = vmatprep.mubr.bf16.mxu0 0
    %304 = vmatmul.mubr.bf16.gmra.mrb[0].mxu0 %v269
    %v305 = vpop.f32.mrb[0].mxu0
    %v306 = vadd.f32 %v266, %v305
    %v307 = vpop.f32.mrb[0].mxu0
    %v308 = vpop.f32.mrb[0].mxu0
    %v309 = vpop.f32.mrb[0].mxu0
    %310 = vdwg.mxu0
    %v311 = vmul.f32 %v306, 0.5
    %v312 = vtanh.pop %v311
    %v313 = vadd.f32 %v312, 1.0
    %v314 = vmul.f32 %v313, 0.5
    %316 = vrot.lane.b32.xlu0 %v314, 16
    %v317 = vpop.permute.xlu0 %316
    %320 = vrot.lane.b32.xlu0 %v306, 16
    %v321 = vpop.permute.xlu0 %320
    %v323 = vsel %vm72, %v176, %v317
    %v324 = vsel %vm137, %v323, %v321
    %vm325 = vcmask 392192
    %326 = vst.msk [vmem:[#allocation7] sm:$0xff] %vm325, %v324
    // Predicated region
    $region38: #{tpu_custom_call.1} parent=1 // pred_check
      _
    $region39: #{tpu_custom_call.1} parent=1 // pred_check_branch
      %328 = sbr.rel (0) target = $region41
    $region40: #{tpu_custom_call.1} parent=1 // pred_region
      %s330 = ssub.s32 128, 128
      %331 = vsyncadd [#allocation4], %s330
      %s333 = sshll.u32 [#allocation7], 4
      %s334 = int_to_ptr.vmem [resolvable:$true] %s333
      %336 = dma.vmem_to_hbm [thread:$0]  %s334, 128, %s7, [#allocation4]
    $region41: #{tpu_custom_call.1} parent=1 // pred_fallthru
      _
    // Predicated region
    $region42: #{tpu_custom_call.1} parent=1 // pred_check
      _
    $region43: #{tpu_custom_call.1} parent=1 // pred_check_branch
      %338 = sbr.rel (0) target = $region45
    $region44: #{tpu_custom_call.1} parent=1 // pred_region
      %339 = dma.done [#allocation4], 128
    $region45: #{tpu_custom_call.1} parent=1 // pred_fallthru
      _
    %340 = vsyncpa [#allocation3], 1
    %341 = vsyncpa [#allocation6], 1
    %342 = vsyncpa [#allocation4], 1

// kernel: tpu_custom_call.1
$region0: #{tpu_custom_call.1}
  #allocation0 [shape = 'u32[]', space=smem, size = 0x4, offset = 0x4, fixed_abs, tag = 'smem constant byte address 0x4 - core index']
  #allocation1 [shape = 'u32[144,128]{1,0:T(1,128)}', space=vmem, size = 0x12000, scoped, tag = 'internal scratch']
  %s0 = inlined_call_operand.vmem [shape: f32[8,16], index: 0, kind: input, shape index: {}]
  %s1 = inlined_call_operand.hbm [shape: f32[8,8], index: 1, kind: input, shape index: {}]
  %s2 = inlined_call_operand.hbm [shape: bf16[16,32], index: 2, kind: input, shape index: {}]
  %s3 = inlined_call_operand.vmem [shape: bf16[32,16], index: 3, kind: input, shape index: {}]
  %s4 = inlined_call_operand.vmem [shape: bf16[8,32], index: 4, kind: input, shape index: {}]
  %s5 = inlined_call_operand.vmem [shape: bf16[32,32], index: 5, kind: input, shape index: {}]
  %s6 = inlined_call_operand.vmem [shape: f32[1,112], index: 6, kind: input, shape index: {}]
  %s7 = inlined_call_operand.hbm [shape: f32[8,48], index: 7, kind: output, shape index: {}]
  %s8 = sld [smem:[#allocation0]]
  $region46: #{tpu_custom_call.1} parent=0
    _
  %s10 = ssub.s32 1, %s8
  %s11 = scalar_select 0, %s10, %s8
  $region1: #{tpu_custom_call.1} parent=0
    #allocation2 [shape = 'u8[4096]{0}', space=vmem, size = 0x1000, scoped, tag = 'input window, operand 1, single buffered']
    #allocation3 [shape = 's32[1]{0}', space=sflag, size = 0x4, scoped, tag = 'scoped memory for tpu_custom_call.1']
    #allocation4 [shape = 's32[1]{0}', space=sflag, size = 0x4, scoped, tag = 'scoped memory for tpu_custom_call.1']
    #allocation5 [shape = 'u8[4096]{0}', space=vmem, size = 0x1000, scoped, tag = 'input window, operand 2, single buffered']
    #allocation6 [shape = 's32[1]{0}', space=sflag, size = 0x4, scoped, tag = 'scoped memory for tpu_custom_call.1']
    #allocation7 [shape = 'u8[4096]{0}', space=vmem, size = 0x1000, scoped, tag = 'output window, operand 0, single buffered']
    %12 = vsyncpa [#allocation3], 0
    %13 = vsyncpa [#allocation6], 0
    %14 = vsyncpa [#allocation4], 0
    // Predicated region
    $region2: #{tpu_custom_call.1} parent=1 // pred_check
      _
    $region3: #{tpu_custom_call.1} parent=1 // pred_check_branch
      %16 = sbr.rel (0) target = $region5
    $region4: #{tpu_custom_call.1} parent=1 // pred_region
      _
    $region5: #{tpu_custom_call.1} parent=1 // pred_fallthru
      _
    // Predicated region
    $region6: #{tpu_custom_call.1} parent=1 // pred_check
      _
    $region7: #{tpu_custom_call.1} parent=1 // pred_check_branch
      %18 = sbr.rel (0) target = $region9
    $region8: #{tpu_custom_call.1} parent=1 // pred_region
      %s20 = ssub.s32 128, 128
      %21 = vsyncadd [#allocation3], %s20
      %s23 = sshll.u32 [#allocation2], 4
      %s24 = int_to_ptr.vmem [resolvable:$true] %s23
      %26 = dma.hbm_to_vmem [thread:$0]  %s1, 128, %s24, [#allocation3]
    $region9: #{tpu_custom_call.1} parent=1 // pred_fallthru
      _
    // Predicated region
    $region10: #{tpu_custom_call.1} parent=1 // pred_check
      _
    $region11: #{tpu_custom_call.1} parent=1 // pred_check_branch
      %28 = sbr.rel (0) target = $region13
    $region12: #{tpu_custom_call.1} parent=1 // pred_region
      %s30 = ssub.s32 128, 128
      %31 = vsyncadd [#allocation6], %s30
      %s32 = sshll.u32 [#allocation5], 4
      %s33 = int_to_ptr.vmem [resolvable:$true] %s32
      %38 = dma.hbm_to_vmem [thread:$0]  %s2, 128, %s33, [#allocation6], 64, 64, 4
    $region13: #{tpu_custom_call.1} parent=1 // pred_fallthru
      _
    // Predicated region
    $region14: #{tpu_custom_call.1} parent=1 // pred_check
      _
    $region15: #{tpu_custom_call.1} parent=1 // pred_check_branch
      %40 = sbr.rel (0) target = $region17
    $region16: #{tpu_custom_call.1} parent=1 // pred_region
      _
    $region17: #{tpu_custom_call.1} parent=1 // pred_fallthru
      _
    // Predicated region
    $region18: #{tpu_custom_call.1} parent=1 // pred_check
      _
    $region19: #{tpu_custom_call.1} parent=1 // pred_check_branch
      %42 = sbr.rel (0) target = $region21
    $region20: #{tpu_custom_call.1} parent=1 // pred_region
      _
    $region21: #{tpu_custom_call.1} parent=1 // pred_fallthru
      _
    // Predicated region
    $region22: #{tpu_custom_call.1} parent=1 // pred_check
      _
    $region23: #{tpu_custom_call.1} parent=1 // pred_check_branch
      %44 = sbr.rel (0) target = $region25
    $region24: #{tpu_custom_call.1} parent=1 // pred_region
      _
    $region25: #{tpu_custom_call.1} parent=1 // pred_fallthru
      _
    // Predicated region
    $region26: #{tpu_custom_call.1} parent=1 // pred_check
      _
    $region27: #{tpu_custom_call.1} parent=1 // pred_check_branch
      %46 = sbr.rel (0) target = $region29
    $region28: #{tpu_custom_call.1} parent=1 // pred_region
      _
    $region29: #{tpu_custom_call.1} parent=1 // pred_fallthru
      _
    // Predicated region
    $region30: #{tpu_custom_call.1} parent=1 // pred_check
      _
    $region31: #{tpu_custom_call.1} parent=1 // pred_check_branch
      %48 = sbr.rel (0) target = $region33
    $region32: #{tpu_custom_call.1} parent=1 // pred_region
      %49 = dma.done [#allocation3], 128
    $region33: #{tpu_custom_call.1} parent=1 // pred_fallthru
      _
    // Predicated region
    $region34: #{tpu_custom_call.1} parent=1 // pred_check
      _
    $region35: #{tpu_custom_call.1} parent=1 // pred_check_branch
      %51 = sbr.rel (0) target = $region37
    $region36: #{tpu_custom_call.1} parent=1 // pred_region
      %52 = dma.done [#allocation6], 128
    $region37: #{tpu_custom_call.1} parent=1 // pred_fallthru
      _
    %v54 = vld [vmem:[%s0] sm:$0xff]
    %v55 = vld [vmem:[#allocation2] sm:$0xff]
    %v56 = vld [vmem:[%s6] sm:$0x1]
    %v57 = vpack.c.bf16 %v54, %v54
    %v58 = vld [vmem:[#allocation5] sm:$0xf]
    %v59 = vld [vmem:[#allocation5 + $0x4] sm:$0xf]
    %v61 = vlaneseq
    %v62 = vshrl.u32 %v61, 7
    %v63 = vsub.s32 0, %v62
    %v64 = vrot.slane %v56, %v63
    %v68 = vunpack.c.l.b16 %v58
    %v69 = vunpack.c.l.b16 %v59
    %v70 = vpack.c.b16 %v69, %v68
    %vm72 = vcmask 130048
    %v74 = vsel %vm72, %v57, 0
    %76 = vmatprep.subr.bf16.mxu0 0
    %77 = vmatpush1.bf16.msra.mxu0 %v70
    %78 = vmatprep.subr.bf16.mxu0 0
    %79 = vmatpush1.bf16.msra.mxu0 0
    %80 = vmatprep.subr.bf16.mxu0 0
    %81 = vmatpush1.bf16.msra.mxu0 0
    %82 = vmatprep.subr.bf16.mxu0 0
    %83 = vmatpush1.bf16.msra.mxu0 0
    %84 = vmatprep.subr.bf16.mxu0 0
    %85 = vmatpush1.bf16.msra.mxu0 0
    %86 = vmatprep.subr.bf16.mxu0 0
    %87 = vmatpush1.bf16.msra.mxu0 0
    %88 = vmatprep.subr.bf16.mxu0 0
    %89 = vmatpush1.bf16.msra.mxu0 0
    %90 = vmatprep.subr.bf16.mxu0 0
    %91 = vmatpush1.bf16.msra.mxu0 0
    %92 = vmatprep.subr.bf16.mxu0 0
    %93 = vmatpush1.bf16.msra.mxu0 0
    %94 = vmatprep.subr.bf16.mxu0 0
    %95 = vmatpush1.bf16.msra.mxu0 0
    %96 = vmatprep.subr.bf16.mxu0 0
    %97 = vmatpush1.bf16.msra.mxu0 0
    %98 = vmatprep.subr.bf16.mxu0 0
    %99 = vmatpush1.bf16.msra.mxu0 0
    %100 = vmatprep.subr.bf16.mxu0 0
    %101 = vmatpush1.bf16.msra.mxu0 0
    %102 = vmatprep.subr.bf16.mxu0 0
    %103 = vmatpush1.bf16.msra.mxu0 0
    %104 = vmatprep.subr.bf16.mxu0 0
    %105 = vmatpush1.bf16.msra.mxu0 0
    %106 = vmatprep.subr.bf16.mxu0 0
    %107 = vmatpush1.bf16.msra.mxu0 0
    %108 = vmatprep.mubr.bf16.mxu0 0
    %109 = vmatmul.mubr.bf16.gmra.mrb[0].mxu0 %v74
    %v110 = vpop.f32.mrb[0].mxu0
    %v111 = vadd.f32 %v64, %v110
    %v112 = vpop.f32.mrb[0].mxu0
    %v113 = vpop.f32.mrb[0].mxu0
    %v114 = vpop.f32.mrb[0].mxu0
    %115 = vdwg.mxu0
    %v116 = vtanh.pop %v111
    %v117 = vpack.c.bf16 %v116, %v116
    %v118 = vld [vmem:[%s3] sm:$0xf]
    %v119 = vld [vmem:[%s3 + $0x4] sm:$0xf]
    %v120 = vld [vmem:[%s3 + $0x8] sm:$0xf]
    %v121 = vld [vmem:[%s3 + $0xc] sm:$0xf]
    %v126 = vunpack.c.l.b16 %v118
    %v127 = vunpack.c.l.b16 %v119
    %v128 = vunpack.c.l.b16 %v120
    %v129 = vunpack.c.l.b16 %v121
    %v130 = vpack.c.b16 %v127, %v126
    %v131 = vpack.c.b16 %v129, %v128
    %134 = vrot.lane.b32.xlu0 %v64, 96
    %v135 = vpop.permute.xlu0 %134
    %vm137 = vcmask 261120
    %v139 = vsel %vm137, %v117, 0
    %141 = vmatprep.subr.bf16.mxu0 0
    %142 = vmatpush1.bf16.msra.mxu0 %v130
    %143 = vmatprep.subr.bf16.mxu0 0
    %144 = vmatpush1.bf16.msra.mxu0 %v131
    %145 = vmatprep.subr.bf16.mxu0 0
    %146 = vmatpush1.bf16.msra.mxu0 0
    %147 = vmatprep.subr.bf16.mxu0 0
    %148 = vmatpush1.bf16.msra.mxu0 0
    %149 = vmatprep.subr.bf16.mxu0 0
    %150 = vmatpush1.bf16.msra.mxu0 0
    %151 = vmatprep.subr.bf16.mxu0 0
    %152 = vmatpush1.bf16.msra.mxu0 0
    %153 = vmatprep.subr.bf16.mxu0 0
    %154 = vmatpush1.bf16.msra.mxu0 0
    %155 = vmatprep.subr.bf16.mxu0 0
    %156 = vmatpush1.bf16.msra.mxu0 0
    %157 = vmatprep.subr.bf16.mxu0 0
    %158 = vmatpush1.bf16.msra.mxu0 0
    %159 = vmatprep.subr.bf16.mxu0 0
    %160 = vmatpush1.bf16.msra.mxu0 0
    %161 = vmatprep.subr.bf16.mxu0 0
    %162 = vmatpush1.bf16.msra.mxu0 0
    %163 = vmatprep.subr.bf16.mxu0 0
    %164 = vmatpush1.bf16.msra.mxu0 0
    %165 = vmatprep.subr.bf16.mxu0 0
    %166 = vmatpush1.bf16.msra.mxu0 0
    %167 = vmatprep.subr.bf16.mxu0 0
    %168 = vmatpush1.bf16.msra.mxu0 0
    %169 = vmatprep.subr.bf16.mxu0 0
    %170 = vmatpush1.bf16.msra.mxu0 0
    %171 = vmatprep.subr.bf16.mxu0 0
    %172 = vmatpush1.bf16.msra.mxu0 0
    %173 = vmatprep.mubr.bf16.mxu0 0
    %174 = vmatmul.mubr.bf16.gmra.mrb[0].mxu0 %v139
    %v175 = vpop.f32.mrb[0].mxu0
    %v176 = vadd.f32 %v135, %v175
    %v177 = vpop.f32.mrb[0].mxu0
    %v178 = vpop.f32.mrb[0].mxu0
    %v179 = vpop.f32.mrb[0].mxu0
    %180 = vdwg.mxu0
    %v181 = vmul.f32 %v176, 0.5
    %v182 = vmul.f32 %v181, 1.442695
    %v183 = vpow.pop %v182
    %185 = vrot.lane.b32.xlu0 %v55, 8
    %v186 = vpop.permute.xlu0 %185
    %v188 = vmul.f32 %v183, %v186
    %190 = vrot.lane.b32.xlu0 %v188, 120
    %v191 = vpop.permute.xlu0 %190
    %v193 = vadd.f32 %v176, %v191
    %v194 = vpack.c.bf16 %v193, %v193
    %v195 = vld [vmem:[%s4] sm:$0xf]
    %196 = vrot.lane.b32.xlu0 %v64, 80
    %v197 = vpop.permute.xlu0 %196
    %vm199 = vcmask 64512
    %v201 = vsel %vm199, %v194, 0
    %vm203 = vcmask 1043456
    %v205 = vsel %vm203, %v195, 0
    %207 = vmatprep.subr.bf16.mxu0 0
    %208 = vmatpush1.bf16.msra.mxu0 %v205
    %209 = vmatprep.subr.bf16.mxu0 0
    %210 = vmatpush1.bf16.msra.mxu0 0
    %211 = vmatprep.subr.bf16.mxu0 0
    %212 = vmatpush1.bf16.msra.mxu0 0
    %213 = vmatprep.subr.bf16.mxu0 0
    %214 = vmatpush1.bf16.msra.mxu0 0
    %215 = vmatprep.subr.bf16.mxu0 0
    %216 = vmatpush1.bf16.msra.mxu0 0
    %217 = vmatprep.subr.bf16.mxu0 0
    %218 = vmatpush1.bf16.msra.mxu0 0
    %219 = vmatprep.subr.bf16.mxu0 0
    %220 = vmatpush1.bf16.msra.mxu0 0
    %221 = vmatprep.subr.bf16.mxu0 0
    %222 = vmatpush1.bf16.msra.mxu0 0
    %223 = vmatprep.subr.bf16.mxu0 0
    %224 = vmatpush1.bf16.msra.mxu0 0
    %225 = vmatprep.subr.bf16.mxu0 0
    %226 = vmatpush1.bf16.msra.mxu0 0
    %227 = vmatprep.subr.bf16.mxu0 0
    %228 = vmatpush1.bf16.msra.mxu0 0
    %229 = vmatprep.subr.bf16.mxu0 0
    %230 = vmatpush1.bf16.msra.mxu0 0
    %231 = vmatprep.subr.bf16.mxu0 0
    %232 = vmatpush1.bf16.msra.mxu0 0
    %233 = vmatprep.subr.bf16.mxu0 0
    %234 = vmatpush1.bf16.msra.mxu0 0
    %235 = vmatprep.subr.bf16.mxu0 0
    %236 = vmatpush1.bf16.msra.mxu0 0
    %237 = vmatprep.subr.bf16.mxu0 0
    %238 = vmatpush1.bf16.msra.mxu0 0
    %239 = vmatprep.mubr.bf16.mxu0 0
    %240 = vmatmul.mubr.bf16.gmra.mrb[0].mxu0 %v201
    %v241 = vpop.f32.mrb[0].mxu0
    %v242 = vadd.f32 %v197, %v241
    %v243 = vpop.f32.mrb[0].mxu0
    %v244 = vpop.f32.mrb[0].mxu0
    %v245 = vpop.f32.mrb[0].mxu0
    %246 = vdwg.mxu0
    %v247 = vtanh.pop %v242
    %v248 = vpack.c.bf16 %v247, %v247
    %v249 = vld [vmem:[%s5] sm:$0xf]
    %v250 = vld [vmem:[%s5 + $0x4] sm:$0xf]
    %v251 = vld [vmem:[%s5 + $0x8] sm:$0xf]
    %v252 = vld [vmem:[%s5 + $0xc] sm:$0xf]
    %v257 = vunpack.c.l.b16 %v249
    %v258 = vunpack.c.l.b16 %v250
    %v259 = vunpack.c.l.b16 %v251
    %v260 = vunpack.c.l.b16 %v252
    %v261 = vpack.c.b16 %v258, %v257
    %v262 = vpack.c.b16 %v260, %v259
    %265 = vrot.lane.b32.xlu0 %v64, 48
    %v266 = vpop.permute.xlu0 %265
    %v269 = vsel %vm137, %v248, 0
    %271 = vmatprep.subr.bf16.mxu0 0
    %272 = vmatpush1.bf16.msra.mxu0 %v261
    %273 = vmatprep.subr.bf16.mxu0 0
    %274 = vmatpush1.bf16.msra.mxu0 %v262
    %275 = vmatprep.subr.bf16.mxu0 0
    %276 = vmatpush1.bf16.msra.mxu0 0
    %277 = vmatprep.subr.bf16.mxu0 0
    %278 = vmatpush1.bf16.msra.mxu0 0
    %279 = vmatprep.subr.bf16.mxu0 0
    %280 = vmatpush1.bf16.msra.mxu0 0
    %281 = vmatprep.subr.bf16.mxu0 0
    %282 = vmatpush1.bf16.msra.mxu0 0
    %283 = vmatprep.subr.bf16.mxu0 0
    %284 = vmatpush1.bf16.msra.mxu0 0
    %285 = vmatprep.subr.bf16.mxu0 0
    %286 = vmatpush1.bf16.msra.mxu0 0
    %287 = vmatprep.subr.bf16.mxu0 0
    %288 = vmatpush1.bf16.msra.mxu0 0
    %289 = vmatprep.subr.bf16.mxu0 0
    %290 = vmatpush1.bf16.msra.mxu0 0
    %291 = vmatprep.subr.bf16.mxu0 0
    %292 = vmatpush1.bf16.msra.mxu0 0
    %293 = vmatprep.subr.bf16.mxu0 0
    %294 = vmatpush1.bf16.msra.mxu0 0
    %295 = vmatprep.subr.bf16.mxu0 0
    %296 = vmatpush1.bf16.msra.mxu0 0
    %297 = vmatprep.subr.bf16.mxu0 0
    %298 = vmatpush1.bf16.msra.mxu0 0
    %299 = vmatprep.subr.bf16.mxu0 0
    %300 = vmatpush1.bf16.msra.mxu0 0
    %301 = vmatprep.subr.bf16.mxu0 0
    %302 = vmatpush1.bf16.msra.mxu0 0
    %303 = vmatprep.mubr.bf16.mxu0 0
    %304 = vmatmul.mubr.bf16.gmra.mrb[0].mxu0 %v269
    %v305 = vpop.f32.mrb[0].mxu0
    %v306 = vadd.f32 %v266, %v305
    %v307 = vpop.f32.mrb[0].mxu0
    %v308 = vpop.f32.mrb[0].mxu0
    %v309 = vpop.f32.mrb[0].mxu0
    %310 = vdwg.mxu0
    %v311 = vmul.f32 %v306, 0.5
    %v312 = vtanh.pop %v311
    %v313 = vadd.f32 %v312, 1.0
    %v314 = vmul.f32 %v313, 0.5
    %316 = vrot.lane.b32.xlu0 %v314, 16
    %v317 = vpop.permute.xlu0 %316
    %320 = vrot.lane.b32.xlu0 %v306, 16
    %v321 = vpop.permute.xlu0 %320
    %v323 = vsel %vm72, %v176, %v317
    %v324 = vsel %vm137, %v323, %v321
    %vm325 = vcmask 392192
    %326 = vst.msk [vmem:[#allocation7] sm:$0xff] %vm325, %v324
    // Predicated region
    $region38: #{tpu_custom_call.1} parent=1 // pred_check
      _
    $region39: #{tpu_custom_call.1} parent=1 // pred_check_branch
      %328 = sbr.rel (0) target = $region41
    $region40: #{tpu_custom_call.1} parent=1 // pred_region
      %s330 = ssub.s32 128, 128
      %331 = vsyncadd [#allocation4], %s330
      %s333 = sshll.u32 [#allocation7], 4
      %s334 = int_to_ptr.vmem [resolvable:$true] %s333
      %336 = dma.vmem_to_hbm [thread:$0]  %s334, 128, %s7, [#allocation4]
    $region41: #{tpu_custom_call.1} parent=1 // pred_fallthru
      _
    // Predicated region
    $region42: #{tpu_custom_call.1} parent=1 // pred_check
      _
    $region43: #{tpu_custom_call.1} parent=1 // pred_check_branch
      %338 = sbr.rel (0) target = $region45
    $region44: #{tpu_custom_call.1} parent=1 // pred_region
      %339 = dma.done [#allocation4], 128
    $region45: #{tpu_custom_call.1} parent=1 // pred_fallthru
      _
    %340 = vsyncpa [#allocation3], 1
    %341 = vsyncpa [#allocation6], 1
    %342 = vsyncpa [#allocation4], 1

</llo_original>
